<compile_context>
chip_gen: v6e
topology: v6e:2x2x1
jax: 0.10.0
libtpu: 0.0.40
codegen_flags: <defaults>
</compile_context>

<pallas_src>
import functools
from math import sqrt

import jax
import jax.numpy as jnp
from jax.experimental import pallas as pl
from jax.experimental.pallas import tpu as pltpu


def _flash_attention_kernel(q_ref, k_ref, v_ref, o_ref, m_scr, l_scr, acc_scr,
                            *, scale):
    # q_ref: (1, 1, tq, E); k_ref: (1, 1, tk, E); v_ref: (1, 1, tk, D)
    kv = pl.program_id(3)

    @pl.when(kv == 0)
    def _init():
        m_scr[...] = jnp.full(m_scr.shape, -jnp.inf, dtype=jnp.float32)
        l_scr[...] = jnp.zeros(l_scr.shape, dtype=jnp.float32)
        acc_scr[...] = jnp.zeros(acc_scr.shape, dtype=jnp.float32)

    q = q_ref[0, 0]                                   # (tq, E), input dtype
    k = k_ref[0, 0]                                   # (tk, E), input dtype
    v = v_ref[0, 0]                                   # (tk, D), input dtype

    # Fold the softmax scale into the small (tq, E) Q tile; keep MXU inputs in
    # the native (e.g. bf16) dtype, accumulate in f32.
    q_scaled = q * jnp.asarray(scale, dtype=q.dtype)

    # scores = (scale * Q) @ K^T without materializing K^T: contract E on both.
    s = jax.lax.dot_general(
        q_scaled, k,
        dimension_numbers=(((1,), (1,)), ((), ())),
        preferred_element_type=jnp.float32,
    )                                                 # (tq, tk) f32

    # Online (streaming) softmax update; statistics stay in f32.
    m_prev = m_scr[...]                               # (tq, 1)
    m_new = jnp.maximum(m_prev, jnp.max(s, axis=-1, keepdims=True))
    alpha = jnp.exp(m_prev - m_new)                   # rescale of old state
    p = jnp.exp(s - m_new)                            # (tq, tk) f32

    l_scr[...] = alpha * l_scr[...] + jnp.sum(p, axis=-1, keepdims=True)
    acc_scr[...] = alpha * acc_scr[...] + jnp.dot(
        p.astype(v.dtype), v, preferred_element_type=jnp.float32)
    m_scr[...] = m_new

    @pl.when(kv == pl.num_programs(3) - 1)
    def _finalize():
        l = l_scr[...]
        # EUP-routed approximate reciprocal + one Newton step (restores full f32
        # accuracy; two extra (tq,1)-sized VPU ops, once per output tile).
        inv = pl.reciprocal(l, approx=True)
        inv = inv * (2.0 - l * inv)
        o_ref[0, 0] = (acc_scr[...] * inv).astype(o_ref.dtype)


def _pick_tile(dim, candidates):
    for c in candidates:
        if dim % c == 0:
            return c
    return dim  # fall back to the whole dimension


def full_attention(queries, keys, values, attn_mask=None, scale=None,
                   block_q=None, block_k=None):
    """queries (B,L,H,E), keys (B,S,H,E), values (B,S,H,D) -> ((B,L,H,D), None)."""
    if attn_mask is not None:
        raise NotImplementedError(
            "Pallas FullAttention implements the mask_flag=False path only "
            "(attn_mask must be None).")

    B, L, H, E = queries.shape
    _, S, _, D = values.shape
    scale = scale if scale is not None else 1.0 / sqrt(E)

    # Tile sizes: big enough to amortize per-step overhead, small enough that
    # double-buffered K/V tiles + the f32 accumulator fit comfortably in scoped
    # VMEM on the tightest generation (v7x: 64 MiB physical / 32 MiB scoped).
    tq = block_q if block_q is not None else _pick_tile(L, (256, 128, 64, 32, 16, 8))
    tk = block_k if block_k is not None else _pick_tile(S, (512, 256, 128, 64, 32, 16, 8))
    assert L % tq == 0 and S % tk == 0, "block sizes must divide L / S"

    # Layout glue: head-major so each (b, h) grid point streams contiguous
    # 2-D tiles through the MXU.
    q_hm = jnp.transpose(queries, (0, 2, 1, 3))   # (B, H, L, E)
    k_hm = jnp.transpose(keys,    (0, 2, 1, 3))   # (B, H, S, E)
    v_hm = jnp.transpose(values,  (0, 2, 1, 3))   # (B, H, S, D)

    kernel = functools.partial(_flash_attention_kernel, scale=scale)

    out_hm = pl.pallas_call(
        kernel,
        out_shape=jax.ShapeDtypeStruct((B, H, L, D), queries.dtype),
        grid_spec=pltpu.PrefetchScalarGridSpec(
            num_scalar_prefetch=0,
            grid=(B, H, L // tq, S // tk),          # reduction (kv) axis last
            in_specs=[
                pl.BlockSpec((1, 1, tq, E), lambda b, h, qi, ki: (b, h, qi, 0)),
                pl.BlockSpec((1, 1, tk, E), lambda b, h, qi, ki: (b, h, ki, 0)),
                pl.BlockSpec((1, 1, tk, D), lambda b, h, qi, ki: (b, h, ki, 0)),
            ],
            out_specs=pl.BlockSpec((1, 1, tq, D), lambda b, h, qi, ki: (b, h, qi, 0)),
            scratch_shapes=[
                pltpu.VMEM((tq, 1), jnp.float32),   # running max m
                pltpu.VMEM((tq, 1), jnp.float32),   # running sum l
                pltpu.VMEM((tq, D), jnp.float32),   # unnormalized output accumulator
            ],
        ),
        compiler_params=pltpu.CompilerParams(
            dimension_semantics=("parallel", "parallel", "parallel", "arbitrary"),
            vmem_limit_bytes=32 * 1024 * 1024,
        ),
    )(q_hm, k_hm, v_hm)

    # Back to the PyTorch output layout (B, L, H, D).
    return jnp.transpose(out_hm, (0, 2, 1, 3)), None


def _reference(queries, keys, values, scale=None):
    B, L, H, E = queries.shape
    scale = scale if scale is not None else 1.0 / sqrt(E)
    scores = jnp.einsum('blhe,bshe->bhls', queries, keys)
    A = jax.nn.softmax(scale * scores, axis=-1)
    return jnp.einsum('bhls,bshd->blhd', A, values)


if __name__ == "__main__":
    # Test 1: small shapes consistent with the module (single kv tile).
    kq, kk, kv_ = jax.random.split(jax.random.PRNGKey(0), 3)
    B, L, S, H, E, D = 2, 8, 8, 4, 32, 32
    queries = jax.random.normal(kq, (B, L, H, E), dtype=jnp.float32)
    keys    = jax.random.normal(kk, (B, S, H, E), dtype=jnp.float32)
    values  = jax.random.normal(kv_, (B, S, H, D), dtype=jnp.float32)

    out, attn = full_attention(queries, keys, values, attn_mask=None)
    out = jax.block_until_ready(out)
    ref = _reference(queries, keys, values)
    assert out.shape == (B, L, H, D)
    assert attn is None
    assert jnp.allclose(out, ref, atol=1e-3, rtol=1e-3)

    # Test 2: multiple q/kv tiles so the cross-step online-softmax accumulation
    # (init / update / finalize) path is actually exercised.
    k2q, k2k, k2v = jax.random.split(jax.random.PRNGKey(1), 3)
    B2, L2, S2, H2, E2, D2 = 1, 64, 64, 2, 32, 32
    q2 = jax.random.normal(k2q, (B2, L2, H2, E2), dtype=jnp.float32)
    k2 = jax.random.normal(k2k, (B2, S2, H2, E2), dtype=jnp.float32)
    v2 = jax.random.normal(k2v, (B2, S2, H2, D2), dtype=jnp.float32)

    out2, _ = full_attention(q2, k2, v2, attn_mask=None, block_q=32, block_k=16)
    out2 = jax.block_until_ready(out2)
    ref2 = _reference(q2, k2, v2)
    assert jnp.allclose(out2, ref2, atol=1e-3, rtol=1e-3)

    print("KERNEL_OK")
</pallas_src>

<mosaic_0001>
module attributes {stable_mosaic.version = 11 : i64} {
  func.func @_flash_attention_kernel(%arg0: i32, %arg1: i32, %arg2: i32, %arg3: i32, %arg4: memref<1x1x8x32xf32, #tpu.memory_space<vmem>>, %arg5: memref<1x1x8x32xf32, #tpu.memory_space<vmem>>, %arg6: memref<1x1x8x32xf32, #tpu.memory_space<vmem>>, %arg7: memref<1x1x8x32xf32, #tpu.memory_space<vmem>>, %arg8: memref<8x1xf32, #tpu.memory_space<vmem>>, %arg9: memref<8x1xf32, #tpu.memory_space<vmem>>, %arg10: memref<8x32xf32, #tpu.memory_space<vmem>>) attributes {dimension_semantics = [#tpu.dimension_semantics<parallel>, #tpu.dimension_semantics<parallel>, #tpu.dimension_semantics<parallel>, #tpu.dimension_semantics<arbitrary>], iteration_bounds = array<i64: 2, 4, 1, 1>, scalar_prefetch = 0 : i64, scratch_operands = 3 : i64, tpu.core_type = #tpu.core_type<tc>, window_params = [{transform_indices = @transform_0, window_bounds = array<i64: 1, 1, 8, 32>}, {transform_indices = @transform_1, window_bounds = array<i64: 1, 1, 8, 32>}, {transform_indices = @transform_2, window_bounds = array<i64: 1, 1, 8, 32>}, {transform_indices = @transform_3, window_bounds = array<i64: 1, 1, 8, 32>}]} {
    %c0_i32 = arith.constant 0 : i32
    %0 = arith.cmpi eq, %arg3, %c0_i32 : i32
    %1 = arith.extui %0 : i1 to i32
    %c0_i32_0 = arith.constant 0 : i32
    %2 = arith.cmpi ne, %1, %c0_i32_0 : i32
    scf.if %2 {
      %cst_30 = arith.constant 0xFF800000 : f32
      %37 = vector.broadcast %cst_30 : f32 to vector<8x1xf32>
      %c0_31 = arith.constant 0 : index
      %c0_32 = arith.constant 0 : index
      %38 = vector.load %arg8[%c0_31, %c0_32] : memref<8x1xf32, #tpu.memory_space<vmem>>, vector<8x1xf32>
      tpu.vector_store %arg8[%c0_31, %c0_32], %37 {strides = array<i32>} : memref<8x1xf32, #tpu.memory_space<vmem>>, vector<8x1xf32>,
      %cst_33 = arith.constant 0.000000e+00 : f32
      %39 = vector.broadcast %cst_33 : f32 to vector<8x1xf32>
      %c0_34 = arith.constant 0 : index
      %c0_35 = arith.constant 0 : index
      %40 = vector.load %arg9[%c0_34, %c0_35] : memref<8x1xf32, #tpu.memory_space<vmem>>, vector<8x1xf32>
      tpu.vector_store %arg9[%c0_34, %c0_35], %39 {strides = array<i32>} : memref<8x1xf32, #tpu.memory_space<vmem>>, vector<8x1xf32>,
      %cst_36 = arith.constant 0.000000e+00 : f32
      %41 = vector.broadcast %cst_36 : f32 to vector<8x32xf32>
      %c0_37 = arith.constant 0 : index
      %c0_38 = arith.constant 0 : index
      %42 = vector.load %arg10[%c0_37, %c0_38] : memref<8x32xf32, #tpu.memory_space<vmem>>, vector<8x32xf32>
      tpu.vector_store %arg10[%c0_37, %c0_38], %41 {strides = array<i32>} : memref<8x32xf32, #tpu.memory_space<vmem>>, vector<8x32xf32>,
    } else {
    }
    %c0 = arith.constant 0 : index
    %c0_1 = arith.constant 0 : index
    %c0_2 = arith.constant 0 : index
    %c0_3 = arith.constant 0 : index
    %3 = vector.load %arg4[%c0, %c0_1, %c0_2, %c0_3] : memref<1x1x8x32xf32, #tpu.memory_space<vmem>>, vector<1x1x8x32xf32>
    %4 = vector.shape_cast %3 : vector<1x1x8x32xf32> to vector<8x32xf32>
    %c0_4 = arith.constant 0 : index
    %c0_5 = arith.constant 0 : index
    %c0_6 = arith.constant 0 : index
    %c0_7 = arith.constant 0 : index
    %5 = vector.load %arg5[%c0_4, %c0_5, %c0_6, %c0_7] : memref<1x1x8x32xf32, #tpu.memory_space<vmem>>, vector<1x1x8x32xf32>
    %6 = vector.shape_cast %5 : vector<1x1x8x32xf32> to vector<8x32xf32>
    %c0_8 = arith.constant 0 : index
    %c0_9 = arith.constant 0 : index
    %c0_10 = arith.constant 0 : index
    %c0_11 = arith.constant 0 : index
    %7 = vector.load %arg6[%c0_8, %c0_9, %c0_10, %c0_11] : memref<1x1x8x32xf32, #tpu.memory_space<vmem>>, vector<1x1x8x32xf32>
    %8 = vector.shape_cast %7 : vector<1x1x8x32xf32> to vector<8x32xf32>
    %cst = arith.constant 0.176776692 : f32
    %9 = vector.broadcast %cst : f32 to vector<8x32xf32>
    %10 = arith.mulf %4, %9 : vector<8x32xf32>
    %cst_12 = arith.constant dense<0.000000e+00> : vector<8x8xf32>
    %11 = tpu.matmul %10, %6, %cst_12 {dimension_numbers = #tpu.dot_dimension_numbers<[1], [1], [0], [0], [0, 0, 1, 0], [], []>} : vector<8x32xf32>, vector<8x32xf32>, vector<8x8xf32> -> vector<8x8xf32>
    %c0_13 = arith.constant 0 : index
    %c0_14 = arith.constant 0 : index
    %12 = vector.load %arg8[%c0_13, %c0_14] : memref<8x1xf32, #tpu.memory_space<vmem>>, vector<8x1xf32>
    %cst_15 = arith.constant dense<0xFF800000> : vector<8xf32>
    %13 = vector.multi_reduction <maximumf>, %11, %cst_15 [1] : vector<8x8xf32> to vector<8xf32>
    %14 = vector.shape_cast %13 : vector<8xf32> to vector<8x1xf32>
    %15 = arith.maximumf %12, %14 : vector<8x1xf32>
    %16 = arith.subf %12, %15 : vector<8x1xf32>
    %17 = math.exp %16 : vector<8x1xf32>
    %18 = vector.broadcast %15 : vector<8x1xf32> to vector<8x8xf32>
    %19 = arith.subf %11, %18 : vector<8x8xf32>
    %20 = math.exp %19 : vector<8x8xf32>
    %c0_16 = arith.constant 0 : index
    %c0_17 = arith.constant 0 : index
    %21 = vector.load %arg9[%c0_16, %c0_17] : memref<8x1xf32, #tpu.memory_space<vmem>>, vector<8x1xf32>
    %22 = arith.mulf %17, %21 : vector<8x1xf32>
    %cst_18 = arith.constant dense<0.000000e+00> : vector<8xf32>
    %23 = vector.multi_reduction <add>, %20, %cst_18 [1] : vector<8x8xf32> to vector<8xf32>
    %24 = vector.shape_cast %23 : vector<8xf32> to vector<8x1xf32>
    %25 = arith.addf %22, %24 : vector<8x1xf32>
    %c0_19 = arith.constant 0 : index
    %c0_20 = arith.constant 0 : index
    %26 = vector.load %arg9[%c0_19, %c0_20] : memref<8x1xf32, #tpu.memory_space<vmem>>, vector<8x1xf32>
    tpu.vector_store %arg9[%c0_19, %c0_20], %25 {strides = array<i32>} : memref<8x1xf32, #tpu.memory_space<vmem>>, vector<8x1xf32>,
    %c0_21 = arith.constant 0 : index
    %c0_22 = arith.constant 0 : index
    %27 = vector.load %arg10[%c0_21, %c0_22] : memref<8x32xf32, #tpu.memory_space<vmem>>, vector<8x32xf32>
    %28 = vector.broadcast %17 : vector<8x1xf32> to vector<8x32xf32>
    %29 = arith.mulf %28, %27 : vector<8x32xf32>
    %cst_23 = arith.constant dense<0.000000e+00> : vector<8x32xf32>
    %30 = tpu.matmul %20, %8, %cst_23 {dimension_numbers = #tpu.dot_dimension_numbers<[1], [0], [0], [1], [0, 0, 1, 1], [], []>} : vector<8x8xf32>, vector<8x32xf32>, vector<8x32xf32> -> vector<8x32xf32>
    %31 = arith.addf %29, %30 : vector<8x32xf32>
    %c0_24 = arith.constant 0 : index
    %c0_25 = arith.constant 0 : index
    %32 = vector.load %arg10[%c0_24, %c0_25] : memref<8x32xf32, #tpu.memory_space<vmem>>, vector<8x32xf32>
    tpu.vector_store %arg10[%c0_24, %c0_25], %31 {strides = array<i32>} : memref<8x32xf32, #tpu.memory_space<vmem>>, vector<8x32xf32>,
    %c0_26 = arith.constant 0 : index
    %c0_27 = arith.constant 0 : index
    %33 = vector.load %arg8[%c0_26, %c0_27] : memref<8x1xf32, #tpu.memory_space<vmem>>, vector<8x1xf32>
    tpu.vector_store %arg8[%c0_26, %c0_27], %15 {strides = array<i32>} : memref<8x1xf32, #tpu.memory_space<vmem>>, vector<8x1xf32>,
    %c0_i32_28 = arith.constant 0 : i32
    %34 = arith.cmpi eq, %arg3, %c0_i32_28 : i32
    %35 = arith.extui %34 : i1 to i32
    %c0_i32_29 = arith.constant 0 : i32
    %36 = arith.cmpi ne, %35, %c0_i32_29 : i32
    scf.if %36 {
      %c0_30 = arith.constant 0 : index
      %c0_31 = arith.constant 0 : index
      %37 = vector.load %arg9[%c0_30, %c0_31] : memref<8x1xf32, #tpu.memory_space<vmem>>, vector<8x1xf32>
      %38 = tpu.reciprocal %37 {approx = true} : vector<8x1xf32> -> vector<8x1xf32>
      %39 = arith.mulf %37, %38 : vector<8x1xf32>
      %cst_32 = arith.constant 2.000000e+00 : f32
      %40 = vector.broadcast %cst_32 : f32 to vector<8x1xf32>
      %41 = arith.subf %40, %39 : vector<8x1xf32>
      %42 = arith.mulf %38, %41 : vector<8x1xf32>
      %c0_33 = arith.constant 0 : index
      %c0_34 = arith.constant 0 : index
      %43 = vector.load %arg10[%c0_33, %c0_34] : memref<8x32xf32, #tpu.memory_space<vmem>>, vector<8x32xf32>
      %44 = vector.broadcast %42 : vector<8x1xf32> to vector<8x32xf32>
      %45 = arith.mulf %43, %44 : vector<8x32xf32>
      %c0_35 = arith.constant 0 : index
      %c0_36 = arith.constant 0 : index
      %c0_37 = arith.constant 0 : index
      %c0_38 = arith.constant 0 : index
      %46 = vector.load %arg7[%c0_35, %c0_36, %c0_37, %c0_38] : memref<1x1x8x32xf32, #tpu.memory_space<vmem>>, vector<1x1x8x32xf32>
      %47 = vector.shape_cast %46 : vector<1x1x8x32xf32> to vector<8x32xf32>
      %48 = vector.shape_cast %45 : vector<8x32xf32> to vector<1x1x8x32xf32>
      tpu.vector_store %arg7[%c0_35, %c0_36, %c0_37, %c0_38], %48 {strides = array<i32>} : memref<1x1x8x32xf32, #tpu.memory_space<vmem>>, vector<1x1x8x32xf32>,
    } else {
    }
    return
  }
  func.func @transform_0(%arg0: i32, %arg1: i32, %arg2: i32, %arg3: i32) -> (i32, i32, i32, i32) {
    %c0_i32 = arith.constant 0 : i32
    %c0_i32_0 = arith.constant 0 : i32
    return %arg0, %arg1, %arg2, %c0_i32 : i32, i32, i32, i32
  }
  func.func @transform_1(%arg0: i32, %arg1: i32, %arg2: i32, %arg3: i32) -> (i32, i32, i32, i32) {
    %c0_i32 = arith.constant 0 : i32
    %c0_i32_0 = arith.constant 0 : i32
    return %arg0, %arg1, %arg3, %c0_i32 : i32, i32, i32, i32
  }
  func.func @transform_2(%arg0: i32, %arg1: i32, %arg2: i32, %arg3: i32) -> (i32, i32, i32, i32) {
    %c0_i32 = arith.constant 0 : i32
    %c0_i32_0 = arith.constant 0 : i32
    return %arg0, %arg1, %arg3, %c0_i32 : i32, i32, i32, i32
  }
  func.func @transform_3(%arg0: i32, %arg1: i32, %arg2: i32, %arg3: i32) -> (i32, i32, i32, i32) {
    %c0_i32 = arith.constant 0 : i32
    %c0_i32_0 = arith.constant 0 : i32
    return %arg0, %arg1, %arg2, %c0_i32 : i32, i32, i32, i32
  }
}

</mosaic_0001>

<llo_original>
// kernel: tpu_custom_call.1
$region0: #{tpu_custom_call.1}
  #allocation0 [shape = 'u32[]', space=smem, size = 0x4, offset = 0x4, fixed_abs, tag = 'smem constant byte address 0x4 - core index']
  #allocation1 [shape = 'u32[144,128]{1,0:T(1,128)}', space=vmem, size = 0x12000, scoped, tag = 'internal scratch']
  #allocation2 [shape = 'f32[8,1]{1,0:T(8,128)}', space=vmem, size = 0x1000, scoped, tag = 'scratch operand']
  #allocation3 [shape = 'f32[8,1]{1,0:T(8,128)}', space=vmem, size = 0x1000, scoped, tag = 'scratch operand']
  #allocation4 [shape = 'f32[8,32]{1,0:T(8,128)}', space=vmem, size = 0x1000, scoped, tag = 'scratch operand']
  %s0 = inlined_call_operand.hbm [shape: f32[2,4,8,32], index: 0, kind: input, shape index: {}]
  %s1 = inlined_call_operand.hbm [shape: f32[2,4,8,32], index: 1, kind: input, shape index: {}]
  %s2 = inlined_call_operand.hbm [shape: f32[2,4,8,32], index: 2, kind: input, shape index: {}]
  %s3 = inlined_call_operand.hbm [shape: f32[2,4,8,32], index: 3, kind: output, shape index: {}]
  %s4 = sld [smem:[#allocation0]]
  $region65: #{tpu_custom_call.1} parent=0
    _
  %s6 = ssub.s32 1, %s4
  %s7 = scalar_select 0, %s6, %s4
  $region1: #{tpu_custom_call.1} parent=0
    #allocation5 [shape = 'u8[8192]{0}', space=vmem, size = 0x2000, scoped, tag = 'input window, operand 0']
    #allocation6 [shape = 's32[2]{0}', space=sflag, size = 0x8, scoped, tag = 'scoped memory for tpu_custom_call.1']
    #allocation7 [shape = 's32[2]{0}', space=sflag, size = 0x8, scoped, tag = 'scoped memory for tpu_custom_call.1']
    #allocation8 [shape = 'u8[8192]{0}', space=vmem, size = 0x2000, scoped, tag = 'input window, operand 1']
    #allocation9 [shape = 's32[2]{0}', space=sflag, size = 0x8, scoped, tag = 'scoped memory for tpu_custom_call.1']
    #allocation10 [shape = 'u8[8192]{0}', space=vmem, size = 0x2000, scoped, tag = 'input window, operand 2']
    #allocation11 [shape = 'u8[8192]{0}', space=vmem, size = 0x2000, scoped, tag = 'output window, operand 0']
    %8 = vsyncpa [#allocation6], 0
    %s9 = scalar_lea.sflag [#allocation6], 1
    %10 = vsyncpa %s9, 0
    %11 = vsyncpa [#allocation9], 0
    %s12 = scalar_lea.sflag [#allocation9], 1
    %13 = vsyncpa %s12, 0
    %14 = vsyncpa [#allocation7], 0
    %s15 = scalar_lea.sflag [#allocation7], 1
    %16 = vsyncpa %s15, 0
    loop: start=0, step=1, limit=10
    $region2: #{tpu_custom_call.1} parent=1 // loop_pre_header
      _
    $region3: #{tpu_custom_call.1} parent=1 // loop_header
      %s18 = sphi 0, %s22
      %p19 = scmp.ge.s32.totalorder %s18, 10
      %s25 = sphi 0, %s51
      %s26 = sphi 0, %s47
      %s27 = sphi 0, %s43
      %s28 = sphi 0, %s39
      %s29 = sphi 0, %s25
      %s30 = sphi 0, %s26
      %s31 = sphi 0, %s27
      %s32 = sphi 0, %s28
      %s33 = sphi 0, %s29
      %s34 = sphi 0, %s30
      %s35 = sphi 0, %s31
      %s36 = sphi 0, %s32
      %s58 = sphi 0, %s60
      %s61 = sphi 0, %s58
      %s62 = sphi 0, %s61
      %s78 = sphi 0, %s62
      %s88 = sphi 0, %s90
      %s91 = sphi 0, %s88
      %s92 = sphi 0, %s91
      %s108 = sphi 0, %s92
      %s118 = sphi 0, %s120
      %s121 = sphi 0, %s118
      %s122 = sphi 0, %s121
      %s138 = sphi 0, %s122
      %s148 = sphi 0, %s150
      %s151 = sphi 0, %s148
      %s152 = sphi 0, %s151
      %s168 = sphi 0, %s152
    $region4: #{tpu_custom_call.1} parent=1 // loop_header_branch
      %21 = sbr.rel (%p19) target = $region8
    $region5: #{tpu_custom_call.1} parent=1 // loop_body
      %s23 = ssub.s32 %s18, 1
      %s24 = ssub.s32 %s18, 2
      %s37 = sadd.s32 1, %s28
      %p38 = scmp.ge.s32.totalorder %s37, 1
      %s39 = scalar_select %p38, 0, %s37
      %s40 = sadd.s32 1, %s27
      %s41 = scalar_select %p38, %s40, %s27
      %p42 = scmp.ge.s32.totalorder %s41, 1
      %s43 = scalar_select %p42, 0, %s41
      %s44 = sadd.s32 1, %s26
      %s45 = scalar_select %p42, %s44, %s26
      %p46 = scmp.ge.s32.totalorder %s45, 4
      %s47 = scalar_select %p46, 0, %s45
      %s48 = sadd.s32 1, %s25
      %s49 = scalar_select %p46, %s48, %s25
      %p50 = scmp.ge.s32.totalorder %s49, 2
      %s51 = scalar_select %p50, 0, %s49
      %s52 = ssub.s32 %s25, %s51
      %s53 = ssub.s32 %s26, %s47
      %s54 = sor.u32 %s52, %s53
      %s55 = ssub.s32 %s27, %s43
      %s56 = sor.u32 %s54, %s55
      %p57 = scmp.eq.s32.totalorder %s56, 0
      %s59 = sadd.s32 %s58, 1
      %s60 = scalar_select %p57, %s58, %s59
      %p63 = pneg %p57
      %p64 = scmp.eq.s32.totalorder %s18, 7
      %p65 = por %p63, %p64
      %p66 = scmp.ne.s32.totalorder %s58, %s61
      %p67 = scmp.eq.s32.totalorder %s18, 0
      %p68 = por %p66, %p67
      %p69 = scmp.ne.s32.totalorder %s58, %s61
      %p70 = scmp.eq.s32.totalorder %s23, 7
      %p71 = por %p69, %p70
      %p72 = scmp.ne.s32.totalorder %s61, %s62
      %p73 = scmp.eq.s32.totalorder %s23, 0
      %p74 = por %p72, %p73
      %p75 = scmp.ne.s32.totalorder %s61, %s62
      %p76 = scmp.eq.s32.totalorder %s24, 7
      %p77 = por %p75, %p76
      %p79 = scmp.ne.s32.totalorder %s62, %s78
      %p80 = scmp.eq.s32.totalorder %s24, 0
      %p81 = por %p79, %p80
      %s82 = ssub.s32 %s25, %s51
      %s83 = ssub.s32 %s26, %s47
      %s84 = sor.u32 %s82, %s83
      %s85 = ssub.s32 %s28, %s39
      %s86 = sor.u32 %s84, %s85
      %p87 = scmp.eq.s32.totalorder %s86, 0
      %s89 = sadd.s32 %s88, 1
      %s90 = scalar_select %p87, %s88, %s89
      %p93 = pneg %p87
      %p94 = scmp.eq.s32.totalorder %s18, 7
      %p95 = por %p93, %p94
      %p96 = scmp.ne.s32.totalorder %s88, %s91
      %p97 = scmp.eq.s32.totalorder %s18, 0
      %p98 = por %p96, %p97
      %p99 = scmp.ne.s32.totalorder %s88, %s91
      %p100 = scmp.eq.s32.totalorder %s23, 7
      %p101 = por %p99, %p100
      %p102 = scmp.ne.s32.totalorder %s91, %s92
      %p103 = scmp.eq.s32.totalorder %s23, 0
      %p104 = por %p102, %p103
      %p105 = scmp.ne.s32.totalorder %s91, %s92
      %p106 = scmp.eq.s32.totalorder %s24, 7
      %p107 = por %p105, %p106
      %p109 = scmp.ne.s32.totalorder %s92, %s108
      %p110 = scmp.eq.s32.totalorder %s24, 0
      %p111 = por %p109, %p110
      %s112 = ssub.s32 %s25, %s51
      %s113 = ssub.s32 %s26, %s47
      %s114 = sor.u32 %s112, %s113
      %s115 = ssub.s32 %s28, %s39
      %s116 = sor.u32 %s114, %s115
      %p117 = scmp.eq.s32.totalorder %s116, 0
      %s119 = sadd.s32 %s118, 1
      %s120 = scalar_select %p117, %s118, %s119
      %p123 = pneg %p117
      %p124 = scmp.eq.s32.totalorder %s18, 7
      %p125 = por %p123, %p124
      %p126 = scmp.ne.s32.totalorder %s118, %s121
      %p127 = scmp.eq.s32.totalorder %s18, 0
      %p128 = por %p126, %p127
      %p129 = scmp.ne.s32.totalorder %s118, %s121
      %p130 = scmp.eq.s32.totalorder %s23, 7
      %p131 = por %p129, %p130
      %p132 = scmp.ne.s32.totalorder %s121, %s122
      %p133 = scmp.eq.s32.totalorder %s23, 0
      %p134 = por %p132, %p133
      %p135 = scmp.ne.s32.totalorder %s121, %s122
      %p136 = scmp.eq.s32.totalorder %s24, 7
      %p137 = por %p135, %p136
      %p139 = scmp.ne.s32.totalorder %s122, %s138
      %p140 = scmp.eq.s32.totalorder %s24, 0
      %p141 = por %p139, %p140
      %s142 = ssub.s32 %s25, %s51
      %s143 = ssub.s32 %s26, %s47
      %s144 = sor.u32 %s142, %s143
      %s145 = ssub.s32 %s27, %s43
      %s146 = sor.u32 %s144, %s145
      %p147 = scmp.eq.s32.totalorder %s146, 0
      %s149 = sadd.s32 %s148, 1
      %s150 = scalar_select %p147, %s148, %s149
      %p153 = pneg %p147
      %p154 = scmp.eq.s32.totalorder %s18, 7
      %p155 = por %p153, %p154
      %p156 = scmp.ne.s32.totalorder %s148, %s151
      %p157 = scmp.eq.s32.totalorder %s18, 0
      %p158 = por %p156, %p157
      %p159 = scmp.ne.s32.totalorder %s148, %s151
      %p160 = scmp.eq.s32.totalorder %s23, 7
      %p161 = por %p159, %p160
      %p162 = scmp.ne.s32.totalorder %s151, %s152
      %p163 = scmp.eq.s32.totalorder %s23, 0
      %p164 = por %p162, %p163
      %p165 = scmp.ne.s32.totalorder %s151, %s152
      %p166 = scmp.eq.s32.totalorder %s24, 7
      %p167 = por %p165, %p166
      %p169 = scmp.ne.s32.totalorder %s152, %s168
      %p170 = scmp.eq.s32.totalorder %s24, 0
      %p171 = por %p169, %p170
      %p172 = scmp.le.s32.totalorder 1, %s18
      %p173 = scmp.lt.s32.totalorder %s18, 9
      %p174 = pnand %p172, %p173
      %p175 = pneg %p174
      // Predicated region
      $region9: #{tpu_custom_call.1} parent=5 // pred_check
        _
      $region10: #{tpu_custom_call.1} parent=5 // pred_check_branch
        %177 = sbr.rel (%p174) target = $region12
      $region11: #{tpu_custom_call.1} parent=5 // pred_region
        %s178 = ssub.s32 %s18, 1
      $region12: #{tpu_custom_call.1} parent=5 // pred_fallthru
        _
      %p179 = scmp.lt.s32.totalorder %s18, 8
      // Predicated region
      $region13: #{tpu_custom_call.1} parent=5 // pred_check
        %p180 = pneg %p179
      $region14: #{tpu_custom_call.1} parent=5 // pred_check_branch
        %182 = sbr.rel (%p180) target = $region16
      $region15: #{tpu_custom_call.1} parent=5 // pred_region
        // Predicated region
        $region17: #{tpu_custom_call.1} parent=15 // pred_check
          %p183 = pneg %p68
        $region18: #{tpu_custom_call.1} parent=15 // pred_check_branch
          %185 = sbr.rel (%p183) target = $region20
        $region19: #{tpu_custom_call.1} parent=15 // pred_region
          %s186 = sand.u32 %s58, 1
          %s187 = scalar_lea.sflag [#allocation6], %s186
          %s188 = sand.u32 %s58, 1
          %s189 = smul.addr %s188, 8
          %s190 = scalar_lea.vmem [#allocation5], %s189
          %s192 = ssub.s32 128, 128
          %193 = vsyncadd %s187, %s192
          %s194 = sadd.s32 %s27, %s26
          %s195 = smul.addr %s25, 4
          %s196 = sadd.s32 %s194, %s195
          %s197 = smul.addr %s196, 128
          %s198 = scalar_lea.hbm %s0, %s197
          %s200 = sshll.u32 %s190, 4
          %s201 = int_to_ptr.vmem [resolvable:$true] %s200
          %203 = dma.hbm_to_vmem [thread:$0]  %s198, 128, %s201, %s187
        $region20: #{tpu_custom_call.1} parent=15 // pred_fallthru
          _
        // Predicated region
        $region21: #{tpu_custom_call.1} parent=15 // pred_check
          %p204 = pneg %p98
        $region22: #{tpu_custom_call.1} parent=15 // pred_check_branch
          %206 = sbr.rel (%p204) target = $region24
        $region23: #{tpu_custom_call.1} parent=15 // pred_region
          %s207 = sand.u32 %s18, 1
          %s208 = scalar_lea.sflag [#allocation9], %s207
          %s209 = sand.u32 %s88, 1
          %s210 = smul.addr %s209, 8
          %s211 = scalar_lea.vmem [#allocation8], %s210
          %s213 = ssub.s32 128, 128
          %214 = vsyncadd %s208, %s213
          %s215 = sadd.s32 %s28, %s26
          %s216 = smul.addr %s25, 4
          %s217 = sadd.s32 %s215, %s216
          %s218 = smul.addr %s217, 128
          %s219 = scalar_lea.hbm %s1, %s218
          %s221 = sshll.u32 %s211, 4
          %s222 = int_to_ptr.vmem [resolvable:$true] %s221
          %224 = dma.hbm_to_vmem [thread:$0]  %s219, 128, %s222, %s208
        $region24: #{tpu_custom_call.1} parent=15 // pred_fallthru
          _
        // Predicated region
        $region25: #{tpu_custom_call.1} parent=15 // pred_check
          %p225 = pneg %p128
        $region26: #{tpu_custom_call.1} parent=15 // pred_check_branch
          %227 = sbr.rel (%p225) target = $region28
        $region27: #{tpu_custom_call.1} parent=15 // pred_region
          %s228 = sand.u32 %s18, 1
          %s229 = scalar_lea.sflag [#allocation9], %s228
          %s230 = sand.u32 %s118, 1
          %s231 = smul.addr %s230, 8
          %s232 = scalar_lea.vmem [#allocation10], %s231
          %s234 = ssub.s32 128, 128
          %235 = vsyncadd %s229, %s234
          %s236 = sadd.s32 %s28, %s26
          %s237 = smul.addr %s25, 4
          %s238 = sadd.s32 %s236, %s237
          %s239 = smul.addr %s238, 128
          %s240 = scalar_lea.hbm %s2, %s239
          %s242 = sshll.u32 %s232, 4
          %s243 = int_to_ptr.vmem [resolvable:$true] %s242
          %245 = dma.hbm_to_vmem [thread:$0]  %s240, 128, %s243, %s229
        $region28: #{tpu_custom_call.1} parent=15 // pred_fallthru
          _
      $region16: #{tpu_custom_call.1} parent=5 // pred_fallthru
        _
      %p246 = scmp.le.s32.totalorder 1, %s18
      %p247 = scmp.lt.s32.totalorder %s18, 9
      %p248 = pnand %p246, %p247
      %p249 = pneg %p248
      // Predicated region
      $region29: #{tpu_custom_call.1} parent=5 // pred_check
        _
      $region30: #{tpu_custom_call.1} parent=5 // pred_check_branch
        %251 = sbr.rel (%p248) target = $region32
      $region31: #{tpu_custom_call.1} parent=5 // pred_region
        %s252 = ssub.s32 %s18, 1
        %s253 = sand.u32 %s61, 1
        %s254 = scalar_lea.sflag [#allocation6], %s253
        %s255 = sand.u32 %s61, 1
        %s256 = smul.addr %s255, 8
        %s257 = scalar_lea.vmem [#allocation5], %s256
        // Predicated region
        $region33: #{tpu_custom_call.1} parent=31 // pred_check
          %p258 = pneg %p74
        $region34: #{tpu_custom_call.1} parent=31 // pred_check_branch
          %260 = sbr.rel (%p258) target = $region36
        $region35: #{tpu_custom_call.1} parent=31 // pred_region
          %261 = dma.done %s254, 128
        $region36: #{tpu_custom_call.1} parent=31 // pred_fallthru
          _
        %s262 = sand.u32 %s23, 1
        %s263 = scalar_lea.sflag [#allocation9], %s262
        %s264 = sand.u32 %s91, 1
        %s265 = smul.addr %s264, 8
        %s266 = scalar_lea.vmem [#allocation8], %s265
        // Predicated region
        $region37: #{tpu_custom_call.1} parent=31 // pred_check
          %p267 = pneg %p104
        $region38: #{tpu_custom_call.1} parent=31 // pred_check_branch
          %269 = sbr.rel (%p267) target = $region40
        $region39: #{tpu_custom_call.1} parent=31 // pred_region
          %270 = dma.done %s263, 128
        $region40: #{tpu_custom_call.1} parent=31 // pred_fallthru
          _
        %s271 = sand.u32 %s23, 1
        %s272 = scalar_lea.sflag [#allocation9], %s271
        %s273 = sand.u32 %s121, 1
        %s274 = smul.addr %s273, 8
        %s275 = scalar_lea.vmem [#allocation10], %s274
        // Predicated region
        $region41: #{tpu_custom_call.1} parent=31 // pred_check
          %p276 = pneg %p134
        $region42: #{tpu_custom_call.1} parent=31 // pred_check_branch
          %278 = sbr.rel (%p276) target = $region44
        $region43: #{tpu_custom_call.1} parent=31 // pred_region
          %279 = dma.done %s272, 128
        $region44: #{tpu_custom_call.1} parent=31 // pred_fallthru
          _
        %s280 = sand.u32 %s61, 1
        %s281 = scalar_lea.sflag [#allocation6], %s280
        %s282 = sand.u32 %s61, 1
        %s283 = smul.addr %s282, 8
        %s284 = scalar_lea.vmem [#allocation5], %s283
        %p285 = pneg %p74
        %p286 = pneg %p71
        %s287 = sand.u32 %s23, 1
        %s288 = scalar_lea.sflag [#allocation9], %s287
        %s289 = sand.u32 %s91, 1
        %s290 = smul.addr %s289, 8
        %s291 = scalar_lea.vmem [#allocation8], %s290
        %p292 = pneg %p104
        %p293 = pneg %p101
        %s294 = sand.u32 %s23, 1
        %s295 = scalar_lea.sflag [#allocation9], %s294
        %s296 = sand.u32 %s121, 1
        %s297 = smul.addr %s296, 8
        %s298 = scalar_lea.vmem [#allocation10], %s297
        %p299 = pneg %p134
        %p300 = pneg %p131
        %p301 = pneg %p164
        %p302 = pneg %p161
        %s303 = sand.u32 %s151, 1
        %s304 = scalar_lea.sflag [#allocation7], %s303
        %s305 = sand.u32 %s151, 1
        %s306 = smul.addr %s305, 8
        %s307 = scalar_lea.vmem [#allocation11], %s306
        %p308 = scmp.eq.s32.totalorder %s32, 0
        // Predicated region
        $region45: #{tpu_custom_call.1} parent=31 // pred_check
          %p309 = pneg %p308
        $region46: #{tpu_custom_call.1} parent=31 // pred_check_branch
          %311 = sbr.rel (%p309) target = $region48
        $region47: #{tpu_custom_call.1} parent=31 // pred_region
          %vm312 = vcmask 7168
          %313 = vst.msk [vmem:[#allocation2] sm:$0xff] %vm312, -inf
          %314 = vst.msk [vmem:[#allocation3] sm:$0xff] %vm312, 0.0
          %vm315 = vcmask 261120
          %316 = vst.msk [vmem:[#allocation4] sm:$0xff] %vm315, 0.0
        $region48: #{tpu_custom_call.1} parent=31 // pred_fallthru
          _
        %v317 = vld [vmem:[%s257] sm:$0xff]
        %v318 = vld [vmem:[%s266] sm:$0xff]
        %v319 = vld [vmem:[%s275] sm:$0xff]
        %v320 = vmul.f32 %v317, 0.17677669
        %vm321 = vcmask 261120
        %v323 = vsel %vm321, %v320, 0
        %v326 = vsel %vm321, %v318, 0
        %328 = vmatprep.subr.mxu0 0.0
        %329 = vmatpush1.xpose.msra.mxu0 0.0
        %330 = vmatprep.subr.mxu0 0.0
        %331 = vmatpush1.xpose.msra.mxu0 0.0
        %332 = vmatprep.subr.mxu0 0.0
        %333 = vmatpush1.xpose.msra.mxu0 0.0
        %334 = vmatprep.subr.mxu0 0.0
        %335 = vmatpush1.xpose.msra.mxu0 0.0
        %336 = vmatprep.subr.mxu0 0.0
        %337 = vmatpush1.xpose.msra.mxu0 0.0
        %338 = vmatprep.subr.mxu0 0.0
        %339 = vmatpush1.xpose.msra.mxu0 0.0
        %340 = vmatprep.subr.mxu0 0.0
        %341 = vmatpush1.xpose.msra.mxu0 0.0
        %342 = vmatprep.subr.mxu0 0.0
        %343 = vmatpush1.xpose.msra.mxu0 0.0
        %344 = vmatprep.subr.mxu0 0.0
        %345 = vmatpush1.xpose.msra.mxu0 0.0
        %346 = vmatprep.subr.mxu0 0.0
        %347 = vmatpush1.xpose.msra.mxu0 0.0
        %348 = vmatprep.subr.mxu0 0.0
        %349 = vmatpush1.xpose.msra.mxu0 0.0
        %350 = vmatprep.subr.mxu0 0.0
        %351 = vmatpush1.xpose.msra.mxu0 0.0
        %352 = vmatprep.subr.mxu0 0.0
        %353 = vmatpush1.xpose.msra.mxu0 0.0
        %354 = vmatprep.subr.mxu0 0.0
        %355 = vmatpush1.xpose.msra.mxu0 0.0
        %356 = vmatprep.subr.mxu0 0.0
        %357 = vmatpush1.xpose.msra.mxu0 0.0
        %358 = vmatprep.subr.mxu0 0.0
        %359 = vmatpush1.xpose.msra.mxu0 %v326
        %360 = vmatprep.subr.mxu0 0.0
        %361 = vmatpush2.xpose.msra.mxu0 0.0
        %362 = vmatprep.subr.mxu0 0.0
        %363 = vmatpush2.xpose.msra.mxu0 0.0
        %364 = vmatprep.subr.mxu0 0.0
        %365 = vmatpush2.xpose.msra.mxu0 0.0
        %366 = vmatprep.subr.mxu0 0.0
        %367 = vmatpush2.xpose.msra.mxu0 0.0
        %368 = vmatprep.subr.mxu0 0.0
        %369 = vmatpush2.xpose.msra.mxu0 0.0
        %370 = vmatprep.subr.mxu0 0.0
        %371 = vmatpush2.xpose.msra.mxu0 0.0
        %372 = vmatprep.subr.mxu0 0.0
        %373 = vmatpush2.xpose.msra.mxu0 0.0
        %374 = vmatprep.subr.mxu0 0.0
        %375 = vmatpush2.xpose.msra.mxu0 0.0
        %376 = vmatprep.subr.mxu0 0.0
        %377 = vmatpush2.xpose.msra.mxu0 0.0
        %378 = vmatprep.subr.mxu0 0.0
        %379 = vmatpush2.xpose.msra.mxu0 0.0
        %380 = vmatprep.subr.mxu0 0.0
        %381 = vmatpush2.xpose.msra.mxu0 0.0
        %382 = vmatprep.subr.mxu0 0.0
        %383 = vmatpush2.xpose.msra.mxu0 0.0
        %384 = vmatprep.subr.mxu0 0.0
        %385 = vmatpush2.xpose.msra.mxu0 0.0
        %386 = vmatprep.subr.mxu0 0.0
        %387 = vmatpush2.xpose.msra.mxu0 0.0
        %388 = vmatprep.subr.mxu0 0.0
        %389 = vmatpush2.xpose.msra.mxu0 0.0
        %390 = vmatprep.subr.mxu0 0.0
        %391 = vmatpush2.xpose.msra.mxu0 0.0
        %392 = vmatprep.mubr.f32.mxu0 0.0
        %393 = vmatmul.mubr.f32.gmra.mxu0 %v323
        %v394 = vpop.f32.mrf.mxu0
        %v395 = vadd.f32 0.0, %v394
        %v396 = vpop.f32.mrf.mxu0
        %397 = vdwg.mxu0
        %v398 = vld [vmem:[#allocation2] sm:$0xff]
        %vm399 = vcmask 64512
        %v400 = vsel %vm399, %v395, -inf
        %401 = vmax.xlane.f32.xlu0 %v400
        %v402 = vpop.xlane.xlu0 %401
        %v403 = vmax.f32 %v398, %v402
        %v404 = vsub.f32 %v398, %v403
        %v405 = vmul.f32 %v404, 1.442695
        %v406 = vpow.pop %v405
        %408 = vset.pattern.permute.xlu0 0
        %409 = vperm.xlu0 %408, %v403
        %v410 = vpop.permute.xlu0 %409
        %v412 = vsub.f32 %v395, %v410
        %v413 = vmul.f32 %v412, 1.442695
        %v414 = vpow.pop %v413
        %v415 = vld [vmem:[#allocation3] sm:$0xff]
        %v416 = vmul.f32 %v406, %v415
        %v417 = vsel %vm399, %v414, 0.0
        %418 = vadd.xlane.f32.xlu0 %v417
        %v419 = vpop.xlane.xlu0 %418
        %v420 = vadd.f32 %v416, %v419
        %vm421 = vcmask 7168
        %422 = vst.msk [vmem:[#allocation3] sm:$0xff] %vm421, %v420
        %v423 = vld [vmem:[#allocation4] sm:$0xff]
        %425 = vset.pattern.permute.xlu0 0
        %426 = vperm.xlu0 %425, %v406
        %v427 = vpop.permute.xlu0 %426
        %v429 = vmul.f32 %v427, %v423
        %v431 = vsel %vm399, %v414, 0
        %433 = vmatprep.subr.mxu0 0.0
        %434 = vmatpush1.msra.mxu0 0.0
        %435 = vmatprep.subr.mxu0 0.0
        %436 = vmatpush1.msra.mxu0 0.0
        %437 = vmatprep.subr.mxu0 0.0
        %438 = vmatpush1.msra.mxu0 0.0
        %439 = vmatprep.subr.mxu0 0.0
        %440 = vmatpush1.msra.mxu0 0.0
        %441 = vmatprep.subr.mxu0 0.0
        %442 = vmatpush1.msra.mxu0 0.0
        %443 = vmatprep.subr.mxu0 0.0
        %444 = vmatpush1.msra.mxu0 0.0
        %445 = vmatprep.subr.mxu0 0.0
        %446 = vmatpush1.msra.mxu0 0.0
        %447 = vmatprep.subr.mxu0 0.0
        %448 = vmatpush1.msra.mxu0 0.0
        %449 = vmatprep.subr.mxu0 0.0
        %450 = vmatpush1.msra.mxu0 0.0
        %451 = vmatprep.subr.mxu0 0.0
        %452 = vmatpush1.msra.mxu0 0.0
        %453 = vmatprep.subr.mxu0 0.0
        %454 = vmatpush1.msra.mxu0 0.0
        %455 = vmatprep.subr.mxu0 0.0
        %456 = vmatpush1.msra.mxu0 0.0
        %457 = vmatprep.subr.mxu0 0.0
        %458 = vmatpush1.msra.mxu0 0.0
        %459 = vmatprep.subr.mxu0 0.0
        %460 = vmatpush1.msra.mxu0 0.0
        %461 = vmatprep.subr.mxu0 0.0
        %462 = vmatpush1.msra.mxu0 0.0
        %463 = vmatprep.subr.mxu0 0.0
        %464 = vmatpush1.msra.mxu0 %v319
        %465 = vmatprep.subr.mxu0 0.0
        %466 = vmatpush2.msra.mxu0 0.0
        %467 = vmatprep.subr.mxu0 0.0
        %468 = vmatpush2.msra.mxu0 0.0
        %469 = vmatprep.subr.mxu0 0.0
        %470 = vmatpush2.msra.mxu0 0.0
        %471 = vmatprep.subr.mxu0 0.0
        %472 = vmatpush2.msra.mxu0 0.0
        %473 = vmatprep.subr.mxu0 0.0
        %474 = vmatpush2.msra.mxu0 0.0
        %475 = vmatprep.subr.mxu0 0.0
        %476 = vmatpush2.msra.mxu0 0.0
        %477 = vmatprep.subr.mxu0 0.0
        %478 = vmatpush2.msra.mxu0 0.0
        %479 = vmatprep.subr.mxu0 0.0
        %480 = vmatpush2.msra.mxu0 0.0
        %481 = vmatprep.subr.mxu0 0.0
        %482 = vmatpush2.msra.mxu0 0.0
        %483 = vmatprep.subr.mxu0 0.0
        %484 = vmatpush2.msra.mxu0 0.0
        %485 = vmatprep.subr.mxu0 0.0
        %486 = vmatpush2.msra.mxu0 0.0
        %487 = vmatprep.subr.mxu0 0.0
        %488 = vmatpush2.msra.mxu0 0.0
        %489 = vmatprep.subr.mxu0 0.0
        %490 = vmatpush2.msra.mxu0 0.0
        %491 = vmatprep.subr.mxu0 0.0
        %492 = vmatpush2.msra.mxu0 0.0
        %493 = vmatprep.subr.mxu0 0.0
        %494 = vmatpush2.msra.mxu0 0.0
        %495 = vmatprep.subr.mxu0 0.0
        %496 = vmatpush2.msra.mxu0 0.0
        %497 = vmatprep.mubr.f32.mxu0 0.0
        %498 = vmatmul.mubr.f32.gmra.mxu0 %v431
        %v499 = vpop.f32.mrf.mxu0
        %v500 = vadd.f32 0.0, %v499
        %v501 = vpop.f32.mrf.mxu0
        %502 = vdwg.mxu0
        %v503 = vadd.f32 %v429, %v500
        %504 = vst.msk [vmem:[#allocation4] sm:$0xff] %vm321, %v503
        %505 = vst.msk [vmem:[#allocation2] sm:$0xff] %vm421, %v403
        // Predicated region
        $region49: #{tpu_custom_call.1} parent=31 // pred_check
          %p506 = pneg %p308
        $region50: #{tpu_custom_call.1} parent=31 // pred_check_branch
          %508 = sbr.rel (%p506) target = $region52
        $region51: #{tpu_custom_call.1} parent=31 // pred_region
          %v509 = vld [vmem:[#allocation3] sm:$0xff]
          %v510 = vrcp.pop %v509
          %v511 = vmul.f32 %v509, %v510
          %v512 = vsub.f32 2.0, %v511
          %v513 = vmul.f32 %v510, %v512
          %v514 = vld [vmem:[#allocation4] sm:$0xff]
          %516 = vset.pattern.permute.xlu0 0
          %517 = vperm.xlu0 %516, %v513
          %v518 = vpop.permute.xlu0 %517
          %v520 = vmul.f32 %v514, %v518
          %521 = vst.msk [vmem:[%s307] sm:$0xff] %vm321, %v520
        $region52: #{tpu_custom_call.1} parent=31 // pred_fallthru
          _
        %s522 = sand.u32 %s151, 1
        %s523 = scalar_lea.sflag [#allocation7], %s522
        %s524 = sand.u32 %s151, 1
        %s525 = smul.addr %s524, 8
        %s526 = scalar_lea.vmem [#allocation11], %s525
        // Predicated region
        $region53: #{tpu_custom_call.1} parent=31 // pred_check
          %p527 = pneg %p161
        $region54: #{tpu_custom_call.1} parent=31 // pred_check_branch
          %529 = sbr.rel (%p527) target = $region56
        $region55: #{tpu_custom_call.1} parent=31 // pred_region
          %s531 = ssub.s32 128, 128
          %532 = vsyncadd %s523, %s531
          %s533 = sadd.s32 %s31, %s30
          %s534 = smul.addr %s29, 4
          %s535 = sadd.s32 %s533, %s534
          %s536 = smul.addr %s535, 128
          %s537 = scalar_lea.hbm %s3, %s536
          %s539 = sshll.u32 %s526, 4
          %s540 = int_to_ptr.vmem [resolvable:$true] %s539
          %542 = dma.vmem_to_hbm [thread:$0]  %s540, 128, %s537, %s523
        $region56: #{tpu_custom_call.1} parent=31 // pred_fallthru
          _
      $region32: #{tpu_custom_call.1} parent=5 // pred_fallthru
        _
      %p543 = scmp.le.s32.totalorder 2, %s18
      // Predicated region
      $region57: #{tpu_custom_call.1} parent=5 // pred_check
        %p544 = pneg %p543
      $region58: #{tpu_custom_call.1} parent=5 // pred_check_branch
        %546 = sbr.rel (%p544) target = $region60
      $region59: #{tpu_custom_call.1} parent=5 // pred_region
        %s547 = ssub.s32 %s18, 2
        // Predicated region
        $region61: #{tpu_custom_call.1} parent=59 // pred_check
          %p548 = pneg %p167
        $region62: #{tpu_custom_call.1} parent=59 // pred_check_branch
          %550 = sbr.rel (%p548) target = $region64
        $region63: #{tpu_custom_call.1} parent=59 // pred_region
          %s551 = sand.u32 %s152, 1
          %s552 = scalar_lea.sflag [#allocation7], %s551
          %s553 = sand.u32 %s152, 1
          %s554 = smul.addr %s553, 8
          %s555 = scalar_lea.vmem [#allocation11], %s554
          %556 = dma.done %s552, 128
        $region64: #{tpu_custom_call.1} parent=59 // pred_fallthru
          _
      $region60: #{tpu_custom_call.1} parent=5 // pred_fallthru
        _
    $region6: #{tpu_custom_call.1} parent=1 // loop_footer
      %s22 = sadd.s32 1, %s18
    $region7: #{tpu_custom_call.1} parent=1 // loop_footer_branch
      %17 = sbr.rel target = $region3
    $region8: #{tpu_custom_call.1} parent=1 // loop_exit
      _
    %557 = vsyncpa [#allocation6], 1
    %s558 = scalar_lea.sflag [#allocation6], 1
    %559 = vsyncpa %s558, 1
    %560 = vsyncpa [#allocation9], 1
    %s561 = scalar_lea.sflag [#allocation9], 1
    %562 = vsyncpa %s561, 1
    %563 = vsyncpa [#allocation7], 1
    %s564 = scalar_lea.sflag [#allocation7], 1
    %565 = vsyncpa %s564, 1

</llo_original>
